<compile_context>
chip_gen: v7x
topology: tpu7x:2x2x1
jax: 0.10.0
libtpu: 0.0.40
codegen_flags: <defaults>
</compile_context>

<pallas_src>
import functools

import jax
import jax.numpy as jnp
from jax.experimental import pallas as pl
from jax.experimental.pallas import tpu as pltpu


def _leaky_relu(x, slope=0.2):
    # valid for 0 < slope < 1
    return jnp.maximum(x, slope * x)


def _round_up(n, m):
    return ((n + m - 1) // m) * m


def _cdiv(a, b):
    return (a + b - 1) // b


# --------------------------- resident-weights kernel ---------------------------
def customnet_resident_kernel(x_ref, w_in_ref, b_in_ref,
                              w_hid_ref, b_hid_ref,
                              w_out_ref, b_out_ref,
                              o_ref, *, hidden_layers, slope):
    # fc_in + LeakyReLU (bf16 operands, f32 accumulation)
    h = jnp.dot(x_ref[...], w_in_ref[...],
                preferred_element_type=jnp.float32) + b_in_ref[...]
    h = _leaky_relu(h, slope)

    # hidden blocks: (Linear with BN pre-folded) -> Dropout(identity, eval) -> LeakyReLU
    # hidden_layers is a small static int; Python loop unrolls.
    for i in range(hidden_layers):
        h = jnp.dot(h.astype(jnp.bfloat16), w_hid_ref[i],
                    preferred_element_type=jnp.float32) + b_hid_ref[pl.ds(i, 1), :]
        h = _leaky_relu(h, slope)

    # fc_out
    out = jnp.dot(h.astype(jnp.bfloat16), w_out_ref[...],
                  preferred_element_type=jnp.float32) + b_out_ref[...]
    o_ref[...] = out.astype(o_ref.dtype)


# --------------------------- streaming-weights kernel ---------------------------
def customnet_stream_kernel(x_ref, w_in_ref, b_in_ref,
                            w_hid_hbm, b_hid_ref,
                            w_out_ref, b_out_ref,
                            o_ref,
                            h_scratch, wbuf, sem, *, hidden_layers, slope):
    # fc_in + LeakyReLU
    h = jnp.dot(x_ref[...], w_in_ref[...],
                preferred_element_type=jnp.float32) + b_in_ref[...]
    h_scratch[...] = _leaky_relu(h, slope)

    if hidden_layers > 0:
        def fetch(layer, slot):
            pltpu.make_async_copy(w_hid_hbm.at[layer], wbuf.at[slot],
                                  sem.at[slot]).start()

        fetch(0, 0)  # prime the first layer slab

        @pl.loop(0, hidden_layers)
        def _(i):
            slot = i & 1
            pltpu.make_async_copy(w_hid_hbm.at[0], wbuf.at[slot],
                                  sem.at[slot]).wait()

            @pl.when(i + 1 < hidden_layers)
            def _():
                fetch(i + 1, 1 - slot)

            hn = jnp.dot(h_scratch[...].astype(jnp.bfloat16), wbuf[slot],
                         preferred_element_type=jnp.float32) + b_hid_ref[pl.ds(i, 1), :]
            h_scratch[...] = _leaky_relu(hn, slope)

    out = jnp.dot(h_scratch[...].astype(jnp.bfloat16), w_out_ref[...],
                  preferred_element_type=jnp.float32) + b_out_ref[...]
    o_ref[...] = out.astype(o_ref.dtype)


def customnet_forward(x, params, *, hidden_layers, eps=1e-5, slope=0.2,
                      batch_block=256, out_dtype=jnp.float32,
                      stream_weights=None):
    (w_in, b_in, w_hid, b_hid, gamma, beta, mean, var, w_out, b_out) = params
    B, D_in = x.shape
    H = w_in.shape[1]
    D_out = w_out.shape[1]
    L = hidden_layers
    assert L >= 1

    # --- Fold BatchNorm (eval, running stats) into the hidden Linear weights/biases (host side) ---
    # NOTE: scale is folded into the weights before the bf16 cast; if running var is very small the
    # bf16 quantization of the folded weights is amplified (fold scale into the f32 bias path instead
    # if a tighter match against f32 is required).
    scale = gamma * jax.lax.rsqrt(var + eps)                # (L, 1, H)
    w_hid_f = w_hid * scale                                 # (L, H, H), scales output columns
    b_hid_f = ((b_hid - mean) * scale + beta).reshape(L, H)  # (L, H), no wasted sublane dim

    # --- Pad feature dims to lane-dense multiples of 128 (zeros -> exact math preserved) ---
    Dp_in, Hp, Dp_out = _round_up(D_in, 128), _round_up(H, 128), _round_up(D_out, 128)

    def pad2(a, r, c):
        return jnp.pad(a, ((0, r - a.shape[0]), (0, c - a.shape[1])))

    w_in_p = pad2(w_in, Dp_in, Hp).astype(jnp.bfloat16)
    b_in_p = pad2(b_in, 1, Hp).astype(jnp.float32)
    w_hid_p = jnp.pad(w_hid_f, ((0, 0), (0, Hp - H), (0, Hp - H))).astype(jnp.bfloat16)
    b_hid_p = pad2(b_hid_f, L, Hp).astype(jnp.float32)      # (L, Hp)
    w_out_p = pad2(w_out, Hp, Dp_out).astype(jnp.bfloat16)
    b_out_p = pad2(b_out, 1, Dp_out).astype(jnp.float32)

    # --- Batch tiling: multiple of 16 (bf16 sublanes); prefer >= 2 blocks for dual-TC (v7x) ---
    Bp16 = max(16, _round_up(B, 16))
    TB = min(_round_up(batch_block, 16), Bp16)
    if _cdiv(Bp16, TB) < 2 and Bp16 >= 32:
        TB = _round_up(_cdiv(Bp16, 2), 16)
    Bp = _round_up(Bp16, TB)
    n_blocks = Bp // TB
    x_p = jnp.pad(x, ((0, Bp - B), (0, Dp_in - D_in))).astype(jnp.bfloat16)

    # --- Resident vs streaming decision (v7x has only 64 MiB VMEM per TC) ---
    resident_hid_bytes = L * Hp * Hp * 2
    if stream_weights is None:
        stream_weights = resident_hid_bytes > (40 << 20)

    out_elt = jnp.dtype(out_dtype).itemsize

    # --- Explicit VMEM budget: weights + biases + double-buffered I/O tiles + activations ---
    fixed_w_bytes = (Dp_in * Hp + Hp * Dp_out) * 2 + (Hp + L * Hp + Dp_out) * 4
    hid_vmem_bytes = (2 * Hp * Hp * 2) if stream_weights else resident_hid_bytes
    io_bytes = 2 * TB * Dp_in * 2 + 2 * TB * Dp_out * out_elt
    act_bytes = 2 * TB * Hp * 6          # f32 activation + bf16 cast copy, with slack
    vmem_limit = int((fixed_w_bytes + hid_vmem_bytes + io_bytes + act_bytes) * 1.3)
    vmem_limit = min(max(vmem_limit, 32 << 20), 128 << 20)

    # --- Cost estimate for the XLA scheduler ---
    flops = 2 * Bp * Hp * (Dp_in + L * Hp + Dp_out)
    w_hid_hbm_reads = w_hid_p.size * (n_blocks if stream_weights else 1)
    bytes_accessed = (x_p.size * 2 + w_in_p.size * 2 + w_hid_hbm_reads * 2 +
                      w_out_p.size * 2 +
                      (b_in_p.size + b_hid_p.size + b_out_p.size) * 4 +
                      Bp * Dp_out * out_elt)

    # --- BlockSpecs: constant-index blocks single-buffered, x/out tiled over the batch ---
    const_spec = functools.partial(pl.BlockSpec, pipeline_mode=pl.Buffered(1))
    x_spec = pl.BlockSpec((TB, Dp_in), lambda b: (b, 0))
    w_in_spec = const_spec((Dp_in, Hp), lambda b: (0, 0))
    b_in_spec = const_spec((1, Hp), lambda b: (0, 0))
    b_hid_spec = const_spec((L, Hp), lambda b: (0, 0))
    w_out_spec = const_spec((Hp, Dp_out), lambda b: (0, 0))
    b_out_spec = const_spec((1, Dp_out), lambda b: (0, 0))
    out_spec = pl.BlockSpec((TB, Dp_out), lambda b: (b, 0))

    if stream_weights:
        kernel = functools.partial(customnet_stream_kernel,
                                   hidden_layers=L, slope=slope)
        w_hid_spec = pl.BlockSpec(memory_space=pl.ANY)      # stays in HBM, manual DMA
        scratch_shapes = [
            pltpu.VMEM((TB, Hp), jnp.float32),               # activation carry
            pltpu.VMEM((2, Hp, Hp), jnp.bfloat16),           # double-buffered layer slab
            pltpu.SemaphoreType.DMA((2,)),
        ]
    else:
        kernel = functools.partial(customnet_resident_kernel,
                                   hidden_layers=L, slope=slope)
        w_hid_spec = const_spec((L, Hp, Hp), lambda b: (0, 0, 0))
        scratch_shapes = []

    out = pl.pallas_call(
        kernel,
        out_shape=jax.ShapeDtypeStruct((Bp, Dp_out), out_dtype),
        grid=(n_blocks,),
        in_specs=[x_spec, w_in_spec, b_in_spec, w_hid_spec, b_hid_spec,
                  w_out_spec, b_out_spec],
        out_specs=out_spec,
        scratch_shapes=scratch_shapes,
        compiler_params=pltpu.CompilerParams(
            dimension_semantics=("parallel",),
            vmem_limit_bytes=vmem_limit),
        cost_estimate=pl.CostEstimate(flops=int(flops), transcendentals=0,
                                      bytes_accessed=int(bytes_accessed)),
    )(x_p, w_in_p, b_in_p, w_hid_p, b_hid_p, w_out_p, b_out_p)

    return out[:B, :D_out]


def init_params(key, input_size, hidden_size, hidden_layers, out_size):
    ks = jax.random.split(key, 6)
    # Linear weights stored as (in, out); biases as (1, out) for clean broadcast.
    w_in = jax.random.normal(ks[0], (input_size, hidden_size), jnp.float32) * 0.1
    b_in = jax.random.normal(ks[1], (1, hidden_size), jnp.float32) * 0.1
    w_hid = jax.random.normal(ks[2], (hidden_layers, hidden_size, hidden_size),
                              jnp.float32) * 0.1
    b_hid = jax.random.normal(ks[3], (hidden_layers, 1, hidden_size), jnp.float32) * 0.1
    # BatchNorm1d running stats / affine (eval mode defaults).
    gamma = jnp.ones((hidden_layers, 1, hidden_size), jnp.float32)
    beta = jnp.zeros((hidden_layers, 1, hidden_size), jnp.float32)
    mean = jnp.zeros((hidden_layers, 1, hidden_size), jnp.float32)
    var = jnp.ones((hidden_layers, 1, hidden_size), jnp.float32)
    w_out = jax.random.normal(ks[4], (hidden_size, out_size), jnp.float32) * 0.1
    b_out = jax.random.normal(ks[5], (1, out_size), jnp.float32) * 0.1
    return (w_in, b_in, w_hid, b_hid, gamma, beta, mean, var, w_out, b_out)


def reference_forward_f32(x, params, *, hidden_layers, eps=1e-5, slope=0.2):
    """Pure f32 reference matching the PyTorch eval-mode forward."""
    (w_in, b_in, w_hid, b_hid, gamma, beta, mean, var, w_out, b_out) = params
    h = _leaky_relu(x @ w_in + b_in, slope)
    for i in range(hidden_layers):
        h = h @ w_hid[i] + b_hid[i]
        h = (h - mean[i]) * jax.lax.rsqrt(var[i] + eps) * gamma[i] + beta[i]
        h = _leaky_relu(h, slope)
    return h @ w_out + b_out


def reference_forward_bf16(x, params, *, hidden_layers, eps=1e-5, slope=0.2):
    """Reference replicating the kernel's bf16-operand / f32-accumulate path."""
    (w_in, b_in, w_hid, b_hid, gamma, beta, mean, var, w_out, b_out) = params
    scale = gamma * jax.lax.rsqrt(var + eps)
    w_hid_f = (w_hid * scale).astype(jnp.bfloat16)
    b_hid_f = (b_hid - mean) * scale + beta
    h = jnp.dot(x.astype(jnp.bfloat16), w_in.astype(jnp.bfloat16),
                preferred_element_type=jnp.float32) + b_in
    h = _leaky_relu(h, slope)
    for i in range(hidden_layers):
        h = jnp.dot(h.astype(jnp.bfloat16), w_hid_f[i],
                    preferred_element_type=jnp.float32) + b_hid_f[i]
        h = _leaky_relu(h, slope)
    return jnp.dot(h.astype(jnp.bfloat16), w_out.astype(jnp.bfloat16),
                   preferred_element_type=jnp.float32) + b_out


if __name__ == "__main__":
    input_size, hidden_size, hidden_layers, out_size = 32, 32, 2, 16
    batch = 8

    key = jax.random.PRNGKey(0)
    kx, kp = jax.random.split(key)
    x = jax.random.normal(kx, (batch, input_size), jnp.float32)
    params = init_params(kp, input_size, hidden_size, hidden_layers, out_size)

    ref_bf16 = reference_forward_bf16(x, params, hidden_layers=hidden_layers)
    ref_f32 = reference_forward_f32(x, params, hidden_layers=hidden_layers)

    # Resident-weights path (default for small models).
    out = customnet_forward(x, params, hidden_layers=hidden_layers)
    out = jax.block_until_ready(out)
    assert out.shape == (batch, out_size)
    assert jnp.allclose(out, ref_bf16, atol=1e-3, rtol=1e-3), "resident: mismatch vs bf16 reference"
    assert jnp.allclose(out, ref_f32, atol=5e-2, rtol=5e-2), "resident: mismatch vs f32 reference"

    # Weight-streaming path (forced here to exercise the manual-DMA branch).
    out_s = customnet_forward(x, params, hidden_layers=hidden_layers, stream_weights=True)
    out_s = jax.block_until_ready(out_s)
    assert out_s.shape == (batch, out_size)
    assert jnp.allclose(out_s, ref_bf16, atol=1e-3, rtol=1e-3), "streaming: mismatch vs bf16 reference"
    assert jnp.allclose(out_s, ref_f32, atol=5e-2, rtol=5e-2), "streaming: mismatch vs f32 reference"

    print("KERNEL_OK")
</pallas_src>

<mosaic_0001>
module attributes {stable_mosaic.version = 11 : i64} {
  func.func @customnet_resident_kernel(%arg0: i32, %arg1: memref<16x128xbf16, #tpu.memory_space<vmem>>, %arg2: memref<128x128xbf16, #tpu.memory_space<vmem>>, %arg3: memref<1x128xf32, #tpu.memory_space<vmem>>, %arg4: memref<2x128x128xbf16, #tpu.memory_space<vmem>>, %arg5: memref<2x128xf32, #tpu.memory_space<vmem>>, %arg6: memref<128x128xbf16, #tpu.memory_space<vmem>>, %arg7: memref<1x128xf32, #tpu.memory_space<vmem>>, %arg8: memref<16x128xf32, #tpu.memory_space<vmem>>) attributes {dimension_semantics = [#tpu.dimension_semantics<parallel>], iteration_bounds = array<i64: 1>, scalar_prefetch = 0 : i64, scratch_operands = 0 : i64, tpu.core_type = #tpu.core_type<tc>, window_params = [{transform_indices = @transform_0, window_bounds = array<i64: 16, 128>}, {pipeline_mode = #tpu.pipeline_mode<synchronous>, transform_indices = @transform_1, window_bounds = array<i64: 128, 128>}, {pipeline_mode = #tpu.pipeline_mode<synchronous>, transform_indices = @transform_2, window_bounds = array<i64: 1, 128>}, {pipeline_mode = #tpu.pipeline_mode<synchronous>, transform_indices = @transform_3, window_bounds = array<i64: 2, 128, 128>}, {pipeline_mode = #tpu.pipeline_mode<synchronous>, transform_indices = @transform_4, window_bounds = array<i64: 2, 128>}, {pipeline_mode = #tpu.pipeline_mode<synchronous>, transform_indices = @transform_5, window_bounds = array<i64: 128, 128>}, {pipeline_mode = #tpu.pipeline_mode<synchronous>, transform_indices = @transform_6, window_bounds = array<i64: 1, 128>}, {transform_indices = @transform_7, window_bounds = array<i64: 16, 128>}]} {
    %c0 = arith.constant 0 : index
    %c0_0 = arith.constant 0 : index
    %0 = vector.load %arg1[%c0, %c0_0] : memref<16x128xbf16, #tpu.memory_space<vmem>>, vector<16x128xbf16>
    %c0_1 = arith.constant 0 : index
    %c0_2 = arith.constant 0 : index
    %1 = vector.load %arg2[%c0_1, %c0_2] : memref<128x128xbf16, #tpu.memory_space<vmem>>, vector<128x128xbf16>
    %cst = arith.constant dense<0.000000e+00> : vector<16x128xf32>
    %2 = tpu.matmul %0, %1, %cst {dimension_numbers = #tpu.dot_dimension_numbers<[1], [0], [0], [1], [0, 0, 1, 1], [], []>} : vector<16x128xbf16>, vector<128x128xbf16>, vector<16x128xf32> -> vector<16x128xf32>
    %c0_3 = arith.constant 0 : index
    %c0_4 = arith.constant 0 : index
    %3 = vector.load %arg3[%c0_3, %c0_4] : memref<1x128xf32, #tpu.memory_space<vmem>>, vector<1x128xf32>
    %4 = vector.broadcast %3 : vector<1x128xf32> to vector<16x128xf32>
    %5 = arith.addf %2, %4 : vector<16x128xf32>
    %cst_5 = arith.constant 2.000000e-01 : f32
    %6 = vector.broadcast %cst_5 : f32 to vector<16x128xf32>
    %7 = arith.mulf %6, %5 : vector<16x128xf32>
    %8 = arith.maximumf %5, %7 : vector<16x128xf32>
    %9 = arith.truncf %8 : vector<16x128xf32> to vector<16x128xbf16>
    %c0_6 = arith.constant 0 : index
    %c0_7 = arith.constant 0 : index
    %c0_8 = arith.constant 0 : index
    %10 = vector.load %arg4[%c0_6, %c0_7, %c0_8] : memref<2x128x128xbf16, #tpu.memory_space<vmem>>, vector<1x128x128xbf16>
    %11 = vector.shape_cast %10 : vector<1x128x128xbf16> to vector<128x128xbf16>
    %cst_9 = arith.constant dense<0.000000e+00> : vector<16x128xf32>
    %12 = tpu.matmul %9, %11, %cst_9 {dimension_numbers = #tpu.dot_dimension_numbers<[1], [0], [0], [1], [0, 0, 1, 1], [], []>} : vector<16x128xbf16>, vector<128x128xbf16>, vector<16x128xf32> -> vector<16x128xf32>
    %c0_10 = arith.constant 0 : index
    %c0_11 = arith.constant 0 : index
    %13 = vector.load %arg5[%c0_10, %c0_11] : memref<2x128xf32, #tpu.memory_space<vmem>>, vector<1x128xf32>
    %14 = vector.broadcast %13 : vector<1x128xf32> to vector<16x128xf32>
    %15 = arith.addf %12, %14 : vector<16x128xf32>
    %cst_12 = arith.constant 2.000000e-01 : f32
    %16 = vector.broadcast %cst_12 : f32 to vector<16x128xf32>
    %17 = arith.mulf %16, %15 : vector<16x128xf32>
    %18 = arith.maximumf %15, %17 : vector<16x128xf32>
    %19 = arith.truncf %18 : vector<16x128xf32> to vector<16x128xbf16>
    %c1 = arith.constant 1 : index
    %c0_13 = arith.constant 0 : index
    %c0_14 = arith.constant 0 : index
    %20 = vector.load %arg4[%c1, %c0_13, %c0_14] : memref<2x128x128xbf16, #tpu.memory_space<vmem>>, vector<1x128x128xbf16>
    %21 = vector.shape_cast %20 : vector<1x128x128xbf16> to vector<128x128xbf16>
    %cst_15 = arith.constant dense<0.000000e+00> : vector<16x128xf32>
    %22 = tpu.matmul %19, %21, %cst_15 {dimension_numbers = #tpu.dot_dimension_numbers<[1], [0], [0], [1], [0, 0, 1, 1], [], []>} : vector<16x128xbf16>, vector<128x128xbf16>, vector<16x128xf32> -> vector<16x128xf32>
    %c1_16 = arith.constant 1 : index
    %c0_17 = arith.constant 0 : index
    %23 = vector.load %arg5[%c1_16, %c0_17] : memref<2x128xf32, #tpu.memory_space<vmem>>, vector<1x128xf32>
    %24 = vector.broadcast %23 : vector<1x128xf32> to vector<16x128xf32>
    %25 = arith.addf %22, %24 : vector<16x128xf32>
    %cst_18 = arith.constant 2.000000e-01 : f32
    %26 = vector.broadcast %cst_18 : f32 to vector<16x128xf32>
    %27 = arith.mulf %26, %25 : vector<16x128xf32>
    %28 = arith.maximumf %25, %27 : vector<16x128xf32>
    %29 = arith.truncf %28 : vector<16x128xf32> to vector<16x128xbf16>
    %c0_19 = arith.constant 0 : index
    %c0_20 = arith.constant 0 : index
    %30 = vector.load %arg6[%c0_19, %c0_20] : memref<128x128xbf16, #tpu.memory_space<vmem>>, vector<128x128xbf16>
    %cst_21 = arith.constant dense<0.000000e+00> : vector<16x128xf32>
    %31 = tpu.matmul %29, %30, %cst_21 {dimension_numbers = #tpu.dot_dimension_numbers<[1], [0], [0], [1], [0, 0, 1, 1], [], []>} : vector<16x128xbf16>, vector<128x128xbf16>, vector<16x128xf32> -> vector<16x128xf32>
    %c0_22 = arith.constant 0 : index
    %c0_23 = arith.constant 0 : index
    %32 = vector.load %arg7[%c0_22, %c0_23] : memref<1x128xf32, #tpu.memory_space<vmem>>, vector<1x128xf32>
    %33 = vector.broadcast %32 : vector<1x128xf32> to vector<16x128xf32>
    %34 = arith.addf %31, %33 : vector<16x128xf32>
    %c0_24 = arith.constant 0 : index
    %c0_25 = arith.constant 0 : index
    %35 = vector.load %arg8[%c0_24, %c0_25] : memref<16x128xf32, #tpu.memory_space<vmem>>, vector<16x128xf32>
    tpu.vector_store %arg8[%c0_24, %c0_25], %34 {strides = array<i32>} : memref<16x128xf32, #tpu.memory_space<vmem>>, vector<16x128xf32>,
    return
  }
  func.func @transform_0(%arg0: i32) -> (i32, i32) {
    %c0_i32 = arith.constant 0 : i32
    %c0_i32_0 = arith.constant 0 : i32
    return %arg0, %c0_i32 : i32, i32
  }
  func.func @transform_1(%arg0: i32) -> (i32, i32) {
    %c0_i32 = arith.constant 0 : i32
    %c0_i32_0 = arith.constant 0 : i32
    %c0_i32_1 = arith.constant 0 : i32
    return %c0_i32, %c0_i32_0 : i32, i32
  }
  func.func @transform_2(%arg0: i32) -> (i32, i32) {
    %c0_i32 = arith.constant 0 : i32
    %c0_i32_0 = arith.constant 0 : i32
    %c0_i32_1 = arith.constant 0 : i32
    return %c0_i32, %c0_i32_0 : i32, i32
  }
  func.func @transform_3(%arg0: i32) -> (i32, i32, i32) {
    %c0_i32 = arith.constant 0 : i32
    %c0_i32_0 = arith.constant 0 : i32
    %c0_i32_1 = arith.constant 0 : i32
    %c0_i32_2 = arith.constant 0 : i32
    return %c0_i32, %c0_i32_0, %c0_i32_1 : i32, i32, i32
  }
  func.func @transform_4(%arg0: i32) -> (i32, i32) {
    %c0_i32 = arith.constant 0 : i32
    %c0_i32_0 = arith.constant 0 : i32
    %c0_i32_1 = arith.constant 0 : i32
    return %c0_i32, %c0_i32_0 : i32, i32
  }
  func.func @transform_5(%arg0: i32) -> (i32, i32) {
    %c0_i32 = arith.constant 0 : i32
    %c0_i32_0 = arith.constant 0 : i32
    %c0_i32_1 = arith.constant 0 : i32
    return %c0_i32, %c0_i32_0 : i32, i32
  }
  func.func @transform_6(%arg0: i32) -> (i32, i32) {
    %c0_i32 = arith.constant 0 : i32
    %c0_i32_0 = arith.constant 0 : i32
    %c0_i32_1 = arith.constant 0 : i32
    return %c0_i32, %c0_i32_0 : i32, i32
  }
  func.func @transform_7(%arg0: i32) -> (i32, i32) {
    %c0_i32 = arith.constant 0 : i32
    %c0_i32_0 = arith.constant 0 : i32
    return %arg0, %c0_i32 : i32, i32
  }
}

</mosaic_0001>

<llo_original>
// kernel: tpu_custom_call.1
$region0: #{tpu_custom_call.1}
  #allocation0 [shape = 'u32[]', space=smem, size = 0x4, offset = 0x4, fixed_abs, tag = 'smem constant byte address 0x4 - core index']
  #allocation1 [shape = 'u32[144,128]{1,0:T(1,128)}', space=vmem, size = 0x12000, scoped, tag = 'internal scratch']
  %s0 = inlined_call_operand.hbm [shape: bf16[16,128], index: 0, kind: input, shape index: {}]
  %s1 = inlined_call_operand.hbm [shape: bf16[128,128], index: 1, kind: input, shape index: {}]
  %s2 = inlined_call_operand.vmem [shape: f32[1,128], index: 2, kind: input, shape index: {}]
  %s3 = inlined_call_operand.hbm [shape: bf16[2,128,128], index: 3, kind: input, shape index: {}]
  %s4 = inlined_call_operand.vmem [shape: f32[2,128], index: 4, kind: input, shape index: {}]
  %s5 = inlined_call_operand.hbm [shape: bf16[128,128], index: 5, kind: input, shape index: {}]
  %s6 = inlined_call_operand.vmem [shape: f32[1,128], index: 6, kind: input, shape index: {}]
  %s7 = inlined_call_operand.hbm [shape: f32[16,128], index: 7, kind: output, shape index: {}]
  %s8 = sld [smem:[#allocation0]]
  $region54: #{tpu_custom_call.1} parent=0
    _
  %s10 = ssub.s32 1, %s8
  %s11 = scalar_select 0, %s10, %s8
  $region1: #{tpu_custom_call.1} parent=0
    #allocation2 [shape = 'u8[4096]{0}', space=vmem, size = 0x1000, scoped, tag = 'input window, operand 0, single buffered']
    #allocation3 [shape = 's32[1]{0}', space=sflag, size = 0x4, scoped, tag = 'scoped memory for tpu_custom_call.1']
    #allocation4 [shape = 's32[1]{0}', space=sflag, size = 0x4, scoped, tag = 'scoped memory for tpu_custom_call.1']
    #allocation5 [shape = 'u8[32768]{0}', space=vmem, size = 0x8000, scoped, tag = 'input window, operand 1, single buffered']
    #allocation6 [shape = 's32[1]{0}', space=sflag, size = 0x4, scoped, tag = 'scoped memory for tpu_custom_call.1']
    #allocation7 [shape = 'u8[65536]{0}', space=vmem, size = 0x10000, scoped, tag = 'input window, operand 3, single buffered']
    #allocation8 [shape = 'u8[32768]{0}', space=vmem, size = 0x8000, scoped, tag = 'input window, operand 5, single buffered']
    #allocation9 [shape = 's32[1]{0}', space=sflag, size = 0x4, scoped, tag = 'scoped memory for tpu_custom_call.1']
    #allocation10 [shape = 'u8[8192]{0}', space=vmem, size = 0x2000, scoped, tag = 'output window, operand 0, single buffered']
    %12 = vsyncpa [#allocation3], 0
    %13 = vsyncpa [#allocation6], 0
    %14 = vsyncpa [#allocation9], 0
    %15 = vsyncpa [#allocation4], 0
    // Predicated region
    $region2: #{tpu_custom_call.1} parent=1 // pred_check
      _
    $region3: #{tpu_custom_call.1} parent=1 // pred_check_branch
      %17 = sbr.rel (0) target = $region5
    $region4: #{tpu_custom_call.1} parent=1 // pred_region
      %s19 = ssub.s32 128, 128
      %20 = vsyncadd [#allocation3], %s19
      %s21 = sshll.u32 [#allocation2], 4
      %s22 = int_to_ptr.vmem [resolvable:$true] %s21
      %27 = dma.hbm_to_vmem [thread:$0]  %s0, 128, %s22, [#allocation3], 64, 64, 4
    $region5: #{tpu_custom_call.1} parent=1 // pred_fallthru
      _
    // Predicated region
    $region6: #{tpu_custom_call.1} parent=1 // pred_check
      _
    $region7: #{tpu_custom_call.1} parent=1 // pred_check_branch
      %29 = sbr.rel (0) target = $region9
    $region8: #{tpu_custom_call.1} parent=1 // pred_region
      %s31 = ssub.s32 1024, 1024
      %32 = vsyncadd [#allocation6], %s31
      %s33 = sshll.u32 [#allocation5], 4
      %s34 = int_to_ptr.vmem [resolvable:$true] %s33
      %39 = dma.hbm_to_vmem [thread:$0]  %s1, 1024, %s34, [#allocation6], 64, 64, 4
    $region9: #{tpu_custom_call.1} parent=1 // pred_fallthru
      _
    // Predicated region
    $region10: #{tpu_custom_call.1} parent=1 // pred_check
      _
    $region11: #{tpu_custom_call.1} parent=1 // pred_check_branch
      %41 = sbr.rel (0) target = $region13
    $region12: #{tpu_custom_call.1} parent=1 // pred_region
      _
    $region13: #{tpu_custom_call.1} parent=1 // pred_fallthru
      _
    // Predicated region
    $region14: #{tpu_custom_call.1} parent=1 // pred_check
      _
    $region15: #{tpu_custom_call.1} parent=1 // pred_check_branch
      %43 = sbr.rel (0) target = $region17
    $region16: #{tpu_custom_call.1} parent=1 // pred_region
      %s45 = ssub.s32 2048, 2048
      %46 = vsyncadd [#allocation6], %s45
      %s47 = sshll.u32 [#allocation7], 4
      %s48 = int_to_ptr.vmem [resolvable:$true] %s47
      %53 = dma.hbm_to_vmem [thread:$0]  %s3, 2048, %s48, [#allocation6], 64, 64, 4
    $region17: #{tpu_custom_call.1} parent=1 // pred_fallthru
      _
    // Predicated region
    $region18: #{tpu_custom_call.1} parent=1 // pred_check
      _
    $region19: #{tpu_custom_call.1} parent=1 // pred_check_branch
      %55 = sbr.rel (0) target = $region21
    $region20: #{tpu_custom_call.1} parent=1 // pred_region
      _
    $region21: #{tpu_custom_call.1} parent=1 // pred_fallthru
      _
    // Predicated region
    $region22: #{tpu_custom_call.1} parent=1 // pred_check
      _
    $region23: #{tpu_custom_call.1} parent=1 // pred_check_branch
      %57 = sbr.rel (0) target = $region25
    $region24: #{tpu_custom_call.1} parent=1 // pred_region
      %s59 = ssub.s32 1024, 1024
      %60 = vsyncadd [#allocation9], %s59
      %s61 = sshll.u32 [#allocation8], 4
      %s62 = int_to_ptr.vmem [resolvable:$true] %s61
      %67 = dma.hbm_to_vmem [thread:$0]  %s5, 1024, %s62, [#allocation9], 64, 64, 4
    $region25: #{tpu_custom_call.1} parent=1 // pred_fallthru
      _
    // Predicated region
    $region26: #{tpu_custom_call.1} parent=1 // pred_check
      _
    $region27: #{tpu_custom_call.1} parent=1 // pred_check_branch
      %69 = sbr.rel (0) target = $region29
    $region28: #{tpu_custom_call.1} parent=1 // pred_region
      _
    $region29: #{tpu_custom_call.1} parent=1 // pred_fallthru
      _
    // Predicated region
    $region30: #{tpu_custom_call.1} parent=1 // pred_check
      _
    $region31: #{tpu_custom_call.1} parent=1 // pred_check_branch
      %71 = sbr.rel (0) target = $region33
    $region32: #{tpu_custom_call.1} parent=1 // pred_region
      %72 = dma.done [#allocation3], 128
    $region33: #{tpu_custom_call.1} parent=1 // pred_fallthru
      _
    // Predicated region
    $region34: #{tpu_custom_call.1} parent=1 // pred_check
      _
    $region35: #{tpu_custom_call.1} parent=1 // pred_check_branch
      %74 = sbr.rel (0) target = $region37
    $region36: #{tpu_custom_call.1} parent=1 // pred_region
      %75 = dma.done [#allocation6], 1024
    $region37: #{tpu_custom_call.1} parent=1 // pred_fallthru
      _
    // Predicated region
    $region38: #{tpu_custom_call.1} parent=1 // pred_check
      _
    $region39: #{tpu_custom_call.1} parent=1 // pred_check_branch
      %77 = sbr.rel (0) target = $region41
    $region40: #{tpu_custom_call.1} parent=1 // pred_region
      %78 = dma.done [#allocation6], 2048
    $region41: #{tpu_custom_call.1} parent=1 // pred_fallthru
      _
    // Predicated region
    $region42: #{tpu_custom_call.1} parent=1 // pred_check
      _
    $region43: #{tpu_custom_call.1} parent=1 // pred_check_branch
      %80 = sbr.rel (0) target = $region45
    $region44: #{tpu_custom_call.1} parent=1 // pred_region
      %81 = dma.done [#allocation9], 1024
    $region45: #{tpu_custom_call.1} parent=1 // pred_fallthru
      _
    %v83 = vld [vmem:[#allocation2] sm:$0xf]
    %v84 = vld [vmem:[#allocation2 + $0x4] sm:$0xf]
    %v85 = vld [vmem:[#allocation5] sm:$0xf]
    %v86 = vld [vmem:[#allocation5 + $0x4] sm:$0xf]
    %v87 = vld [vmem:[#allocation5 + $0x8] sm:$0xf]
    %v88 = vld [vmem:[#allocation5 + $0xc] sm:$0xf]
    %v89 = vld [vmem:[#allocation5 + $0x10] sm:$0xf]
    %v90 = vld [vmem:[#allocation5 + $0x14] sm:$0xf]
    %v91 = vld [vmem:[#allocation5 + $0x18] sm:$0xf]
    %v92 = vld [vmem:[#allocation5 + $0x1c] sm:$0xf]
    %v93 = vld [vmem:[#allocation5 + $0x20] sm:$0xf]
    %v94 = vld [vmem:[#allocation5 + $0x24] sm:$0xf]
    %v95 = vld [vmem:[#allocation5 + $0x28] sm:$0xf]
    %v96 = vld [vmem:[#allocation5 + $0x2c] sm:$0xf]
    %v97 = vld [vmem:[#allocation5 + $0x30] sm:$0xf]
    %v98 = vld [vmem:[#allocation5 + $0x34] sm:$0xf]
    %v99 = vld [vmem:[#allocation5 + $0x38] sm:$0xf]
    %v100 = vld [vmem:[#allocation5 + $0x3c] sm:$0xf]
    %v101 = vld [vmem:[%s2] sm:$0x1]
    %v103 = vlaneseq
    %v104 = vshrl.u32 %v103, 7
    %v105 = vsub.s32 0, %v104
    %v106 = vrot.slane %v101, %v105
    %v110 = vunpack.c.l.b16 %v83
    %v111 = vunpack.c.l.b16 %v84
    %v112 = vpack.c.b16 %v111, %v110
    %v130 = vunpack.c.l.b16 %v85
    %v131 = vunpack.c.l.b16 %v86
    %v132 = vunpack.c.l.b16 %v87
    %v133 = vunpack.c.l.b16 %v88
    %v134 = vunpack.c.l.b16 %v89
    %v135 = vunpack.c.l.b16 %v90
    %v136 = vunpack.c.l.b16 %v91
    %v137 = vunpack.c.l.b16 %v92
    %v138 = vunpack.c.l.b16 %v93
    %v139 = vunpack.c.l.b16 %v94
    %v140 = vunpack.c.l.b16 %v95
    %v141 = vunpack.c.l.b16 %v96
    %v142 = vunpack.c.l.b16 %v97
    %v143 = vunpack.c.l.b16 %v98
    %v144 = vunpack.c.l.b16 %v99
    %v145 = vunpack.c.l.b16 %v100
    %v146 = vpack.c.b16 %v131, %v130
    %v147 = vpack.c.b16 %v133, %v132
    %v148 = vpack.c.b16 %v135, %v134
    %v149 = vpack.c.b16 %v137, %v136
    %v150 = vpack.c.b16 %v139, %v138
    %v151 = vpack.c.b16 %v141, %v140
    %v152 = vpack.c.b16 %v143, %v142
    %v153 = vpack.c.b16 %v145, %v144
    %162 = vmatprep.subr.bf16.mxu0 0
    %163 = vmatpush1.bf16.msra.mxu0 %v146
    %164 = vmatprep.subr.bf16.mxu0 0
    %165 = vmatpush1.bf16.msra.mxu0 %v147
    %166 = vmatprep.subr.bf16.mxu0 0
    %167 = vmatpush1.bf16.msra.mxu0 %v148
    %168 = vmatprep.subr.bf16.mxu0 0
    %169 = vmatpush1.bf16.msra.mxu0 %v149
    %170 = vmatprep.subr.bf16.mxu0 0
    %171 = vmatpush1.bf16.msra.mxu0 %v150
    %172 = vmatprep.subr.bf16.mxu0 0
    %173 = vmatpush1.bf16.msra.mxu0 %v151
    %174 = vmatprep.subr.bf16.mxu0 0
    %175 = vmatpush1.bf16.msra.mxu0 %v152
    %176 = vmatprep.subr.bf16.mxu0 0
    %177 = vmatpush1.bf16.msra.mxu0 %v153
    %178 = vmatprep.subr.bf16.mxu0 0
    %179 = vmatpush1.bf16.msra.mxu0 0
    %180 = vmatprep.subr.bf16.mxu0 0
    %181 = vmatpush1.bf16.msra.mxu0 0
    %182 = vmatprep.subr.bf16.mxu0 0
    %183 = vmatpush1.bf16.msra.mxu0 0
    %184 = vmatprep.subr.bf16.mxu0 0
    %185 = vmatpush1.bf16.msra.mxu0 0
    %186 = vmatprep.subr.bf16.mxu0 0
    %187 = vmatpush1.bf16.msra.mxu0 0
    %188 = vmatprep.subr.bf16.mxu0 0
    %189 = vmatpush1.bf16.msra.mxu0 0
    %190 = vmatprep.subr.bf16.mxu0 0
    %191 = vmatpush1.bf16.msra.mxu0 0
    %192 = vmatprep.subr.bf16.mxu0 0
    %193 = vmatpush1.bf16.msra.mxu0 0
    %194 = vmatprep.mubr.bf16.mxu0 0
    %195 = vmatmul.mubr.bf16.gmra.mrb[0].mxu0 %v112
    %v196 = vpop.f32.mrb[0].mxu0
    %v197 = vadd.f32 %v106, %v196
    %v198 = vpop.f32.mrb[0].mxu0
    %v199 = vpop.f32.mrb[0].mxu0
    %v200 = vadd.f32 %v106, %v199
    %v201 = vpop.f32.mrb[0].mxu0
    %202 = vdwg.mxu0
    %v203 = vmul.f32 %v197, 0.2
    %v204 = vmul.f32 %v200, 0.2
    %v205 = vmax.f32 %v197, %v203
    %v206 = vmax.f32 %v200, %v204
    %v207 = vpack.c.bf16 %v206, %v205
    %v208 = vld [vmem:[#allocation7] sm:$0xf]
    %v209 = vld [vmem:[#allocation7 + $0x4] sm:$0xf]
    %v210 = vld [vmem:[#allocation7 + $0x8] sm:$0xf]
    %v211 = vld [vmem:[#allocation7 + $0xc] sm:$0xf]
    %v212 = vld [vmem:[#allocation7 + $0x10] sm:$0xf]
    %v213 = vld [vmem:[#allocation7 + $0x14] sm:$0xf]
    %v214 = vld [vmem:[#allocation7 + $0x18] sm:$0xf]
    %v215 = vld [vmem:[#allocation7 + $0x1c] sm:$0xf]
    %v216 = vld [vmem:[#allocation7 + $0x20] sm:$0xf]
    %v217 = vld [vmem:[#allocation7 + $0x24] sm:$0xf]
    %v218 = vld [vmem:[#allocation7 + $0x28] sm:$0xf]
    %v219 = vld [vmem:[#allocation7 + $0x2c] sm:$0xf]
    %v220 = vld [vmem:[#allocation7 + $0x30] sm:$0xf]
    %v221 = vld [vmem:[#allocation7 + $0x34] sm:$0xf]
    %v222 = vld [vmem:[#allocation7 + $0x38] sm:$0xf]
    %v223 = vld [vmem:[#allocation7 + $0x3c] sm:$0xf]
    %v224 = vld [vmem:[%s4] sm:$0x1]
    %v225 = vlaneseq
    %v226 = vshrl.u32 %v225, 7
    %v227 = vsub.s32 0, %v226
    %v228 = vrot.slane %v224, %v227
    %v245 = vunpack.c.l.b16 %v208
    %v246 = vunpack.c.l.b16 %v209
    %v247 = vunpack.c.l.b16 %v210
    %v248 = vunpack.c.l.b16 %v211
    %v249 = vunpack.c.l.b16 %v212
    %v250 = vunpack.c.l.b16 %v213
    %v251 = vunpack.c.l.b16 %v214
    %v252 = vunpack.c.l.b16 %v215
    %v253 = vunpack.c.l.b16 %v216
    %v254 = vunpack.c.l.b16 %v217
    %v255 = vunpack.c.l.b16 %v218
    %v256 = vunpack.c.l.b16 %v219
    %v257 = vunpack.c.l.b16 %v220
    %v258 = vunpack.c.l.b16 %v221
    %v259 = vunpack.c.l.b16 %v222
    %v260 = vunpack.c.l.b16 %v223
    %v261 = vpack.c.b16 %v246, %v245
    %v262 = vpack.c.b16 %v248, %v247
    %v263 = vpack.c.b16 %v250, %v249
    %v264 = vpack.c.b16 %v252, %v251
    %v265 = vpack.c.b16 %v254, %v253
    %v266 = vpack.c.b16 %v256, %v255
    %v267 = vpack.c.b16 %v258, %v257
    %v268 = vpack.c.b16 %v260, %v259
    %277 = vmatprep.subr.bf16.mxu0 0
    %278 = vmatpush1.bf16.msra.mxu0 %v261
    %279 = vmatprep.subr.bf16.mxu0 0
    %280 = vmatpush1.bf16.msra.mxu0 %v262
    %281 = vmatprep.subr.bf16.mxu0 0
    %282 = vmatpush1.bf16.msra.mxu0 %v263
    %283 = vmatprep.subr.bf16.mxu0 0
    %284 = vmatpush1.bf16.msra.mxu0 %v264
    %285 = vmatprep.subr.bf16.mxu0 0
    %286 = vmatpush1.bf16.msra.mxu0 %v265
    %287 = vmatprep.subr.bf16.mxu0 0
    %288 = vmatpush1.bf16.msra.mxu0 %v266
    %289 = vmatprep.subr.bf16.mxu0 0
    %290 = vmatpush1.bf16.msra.mxu0 %v267
    %291 = vmatprep.subr.bf16.mxu0 0
    %292 = vmatpush1.bf16.msra.mxu0 %v268
    %293 = vmatprep.subr.bf16.mxu0 0
    %294 = vmatpush1.bf16.msra.mxu0 0
    %295 = vmatprep.subr.bf16.mxu0 0
    %296 = vmatpush1.bf16.msra.mxu0 0
    %297 = vmatprep.subr.bf16.mxu0 0
    %298 = vmatpush1.bf16.msra.mxu0 0
    %299 = vmatprep.subr.bf16.mxu0 0
    %300 = vmatpush1.bf16.msra.mxu0 0
    %301 = vmatprep.subr.bf16.mxu0 0
    %302 = vmatpush1.bf16.msra.mxu0 0
    %303 = vmatprep.subr.bf16.mxu0 0
    %304 = vmatpush1.bf16.msra.mxu0 0
    %305 = vmatprep.subr.bf16.mxu0 0
    %306 = vmatpush1.bf16.msra.mxu0 0
    %307 = vmatprep.subr.bf16.mxu0 0
    %308 = vmatpush1.bf16.msra.mxu0 0
    %309 = vmatprep.mubr.bf16.mxu0 0
    %310 = vmatmul.mubr.bf16.gmra.mrb[0].mxu0 %v207
    %v311 = vpop.f32.mrb[0].mxu0
    %v312 = vadd.f32 %v228, %v311
    %v313 = vpop.f32.mrb[0].mxu0
    %v314 = vpop.f32.mrb[0].mxu0
    %v315 = vadd.f32 %v228, %v314
    %v316 = vpop.f32.mrb[0].mxu0
    %317 = vdwg.mxu0
    %v318 = vmul.f32 %v312, 0.2
    %v319 = vmul.f32 %v315, 0.2
    %v320 = vmax.f32 %v312, %v318
    %v321 = vmax.f32 %v315, %v319
    %v322 = vpack.c.bf16 %v321, %v320
    %s323 = scalar_lea.vmem [#allocation7], 64
    %v324 = vld [vmem:[%s323] sm:$0xf]
    %v325 = vld [vmem:[%s323 + $0x4] sm:$0xf]
    %v326 = vld [vmem:[%s323 + $0x8] sm:$0xf]
    %v327 = vld [vmem:[%s323 + $0xc] sm:$0xf]
    %v328 = vld [vmem:[%s323 + $0x10] sm:$0xf]
    %v329 = vld [vmem:[%s323 + $0x14] sm:$0xf]
    %v330 = vld [vmem:[%s323 + $0x18] sm:$0xf]
    %v331 = vld [vmem:[%s323 + $0x1c] sm:$0xf]
    %v332 = vld [vmem:[%s323 + $0x20] sm:$0xf]
    %v333 = vld [vmem:[%s323 + $0x24] sm:$0xf]
    %v334 = vld [vmem:[%s323 + $0x28] sm:$0xf]
    %v335 = vld [vmem:[%s323 + $0x2c] sm:$0xf]
    %v336 = vld [vmem:[%s323 + $0x30] sm:$0xf]
    %v337 = vld [vmem:[%s323 + $0x34] sm:$0xf]
    %v338 = vld [vmem:[%s323 + $0x38] sm:$0xf]
    %v339 = vld [vmem:[%s323 + $0x3c] sm:$0xf]
    %v340 = vld [vmem:[%s4 + $0x1] sm:$0x1]
    %v341 = vlaneseq
    %v342 = vshrl.u32 %v341, 7
    %v343 = vsub.s32 0, %v342
    %v344 = vrot.slane %v340, %v343
    %v361 = vunpack.c.l.b16 %v324
    %v362 = vunpack.c.l.b16 %v325
    %v363 = vunpack.c.l.b16 %v326
    %v364 = vunpack.c.l.b16 %v327
    %v365 = vunpack.c.l.b16 %v328
    %v366 = vunpack.c.l.b16 %v329
    %v367 = vunpack.c.l.b16 %v330
    %v368 = vunpack.c.l.b16 %v331
    %v369 = vunpack.c.l.b16 %v332
    %v370 = vunpack.c.l.b16 %v333
    %v371 = vunpack.c.l.b16 %v334
    %v372 = vunpack.c.l.b16 %v335
    %v373 = vunpack.c.l.b16 %v336
    %v374 = vunpack.c.l.b16 %v337
    %v375 = vunpack.c.l.b16 %v338
    %v376 = vunpack.c.l.b16 %v339
    %v377 = vpack.c.b16 %v362, %v361
    %v378 = vpack.c.b16 %v364, %v363
    %v379 = vpack.c.b16 %v366, %v365
    %v380 = vpack.c.b16 %v368, %v367
    %v381 = vpack.c.b16 %v370, %v369
    %v382 = vpack.c.b16 %v372, %v371
    %v383 = vpack.c.b16 %v374, %v373
    %v384 = vpack.c.b16 %v376, %v375
    %393 = vmatprep.subr.bf16.mxu0 0
    %394 = vmatpush1.bf16.msra.mxu0 %v377
    %395 = vmatprep.subr.bf16.mxu0 0
    %396 = vmatpush1.bf16.msra.mxu0 %v378
    %397 = vmatprep.subr.bf16.mxu0 0
    %398 = vmatpush1.bf16.msra.mxu0 %v379
    %399 = vmatprep.subr.bf16.mxu0 0
    %400 = vmatpush1.bf16.msra.mxu0 %v380
    %401 = vmatprep.subr.bf16.mxu0 0
    %402 = vmatpush1.bf16.msra.mxu0 %v381
    %403 = vmatprep.subr.bf16.mxu0 0
    %404 = vmatpush1.bf16.msra.mxu0 %v382
    %405 = vmatprep.subr.bf16.mxu0 0
    %406 = vmatpush1.bf16.msra.mxu0 %v383
    %407 = vmatprep.subr.bf16.mxu0 0
    %408 = vmatpush1.bf16.msra.mxu0 %v384
    %409 = vmatprep.subr.bf16.mxu0 0
    %410 = vmatpush1.bf16.msra.mxu0 0
    %411 = vmatprep.subr.bf16.mxu0 0
    %412 = vmatpush1.bf16.msra.mxu0 0
    %413 = vmatprep.subr.bf16.mxu0 0
    %414 = vmatpush1.bf16.msra.mxu0 0
    %415 = vmatprep.subr.bf16.mxu0 0
    %416 = vmatpush1.bf16.msra.mxu0 0
    %417 = vmatprep.subr.bf16.mxu0 0
    %418 = vmatpush1.bf16.msra.mxu0 0
    %419 = vmatprep.subr.bf16.mxu0 0
    %420 = vmatpush1.bf16.msra.mxu0 0
    %421 = vmatprep.subr.bf16.mxu0 0
    %422 = vmatpush1.bf16.msra.mxu0 0
    %423 = vmatprep.subr.bf16.mxu0 0
    %424 = vmatpush1.bf16.msra.mxu0 0
    %425 = vmatprep.mubr.bf16.mxu0 0
    %426 = vmatmul.mubr.bf16.gmra.mrb[0].mxu0 %v322
    %v427 = vpop.f32.mrb[0].mxu0
    %v428 = vadd.f32 %v344, %v427
    %v429 = vpop.f32.mrb[0].mxu0
    %v430 = vpop.f32.mrb[0].mxu0
    %v431 = vadd.f32 %v344, %v430
    %v432 = vpop.f32.mrb[0].mxu0
    %433 = vdwg.mxu0
    %v434 = vmul.f32 %v428, 0.2
    %v435 = vmul.f32 %v431, 0.2
    %v436 = vmax.f32 %v428, %v434
    %v437 = vmax.f32 %v431, %v435
    %v438 = vpack.c.bf16 %v437, %v436
    %v439 = vld [vmem:[#allocation8] sm:$0xf]
    %v440 = vld [vmem:[#allocation8 + $0x4] sm:$0xf]
    %v441 = vld [vmem:[#allocation8 + $0x8] sm:$0xf]
    %v442 = vld [vmem:[#allocation8 + $0xc] sm:$0xf]
    %v443 = vld [vmem:[#allocation8 + $0x10] sm:$0xf]
    %v444 = vld [vmem:[#allocation8 + $0x14] sm:$0xf]
    %v445 = vld [vmem:[#allocation8 + $0x18] sm:$0xf]
    %v446 = vld [vmem:[#allocation8 + $0x1c] sm:$0xf]
    %v447 = vld [vmem:[#allocation8 + $0x20] sm:$0xf]
    %v448 = vld [vmem:[#allocation8 + $0x24] sm:$0xf]
    %v449 = vld [vmem:[#allocation8 + $0x28] sm:$0xf]
    %v450 = vld [vmem:[#allocation8 + $0x2c] sm:$0xf]
    %v451 = vld [vmem:[#allocation8 + $0x30] sm:$0xf]
    %v452 = vld [vmem:[#allocation8 + $0x34] sm:$0xf]
    %v453 = vld [vmem:[#allocation8 + $0x38] sm:$0xf]
    %v454 = vld [vmem:[#allocation8 + $0x3c] sm:$0xf]
    %v455 = vld [vmem:[%s6] sm:$0x1]
    %v457 = vlaneseq
    %v458 = vshrl.u32 %v457, 7
    %v459 = vsub.s32 0, %v458
    %v460 = vrot.slane %v455, %v459
    %v478 = vunpack.c.l.b16 %v439
    %v479 = vunpack.c.l.b16 %v440
    %v480 = vunpack.c.l.b16 %v441
    %v481 = vunpack.c.l.b16 %v442
    %v482 = vunpack.c.l.b16 %v443
    %v483 = vunpack.c.l.b16 %v444
    %v484 = vunpack.c.l.b16 %v445
    %v485 = vunpack.c.l.b16 %v446
    %v486 = vunpack.c.l.b16 %v447
    %v487 = vunpack.c.l.b16 %v448
    %v488 = vunpack.c.l.b16 %v449
    %v489 = vunpack.c.l.b16 %v450
    %v490 = vunpack.c.l.b16 %v451
    %v491 = vunpack.c.l.b16 %v452
    %v492 = vunpack.c.l.b16 %v453
    %v493 = vunpack.c.l.b16 %v454
    %v494 = vpack.c.b16 %v479, %v478
    %v495 = vpack.c.b16 %v481, %v480
    %v496 = vpack.c.b16 %v483, %v482
    %v497 = vpack.c.b16 %v485, %v484
    %v498 = vpack.c.b16 %v487, %v486
    %v499 = vpack.c.b16 %v489, %v488
    %v500 = vpack.c.b16 %v491, %v490
    %v501 = vpack.c.b16 %v493, %v492
    %510 = vmatprep.subr.bf16.mxu0 0
    %511 = vmatpush1.bf16.msra.mxu0 %v494
    %512 = vmatprep.subr.bf16.mxu0 0
    %513 = vmatpush1.bf16.msra.mxu0 %v495
    %514 = vmatprep.subr.bf16.mxu0 0
    %515 = vmatpush1.bf16.msra.mxu0 %v496
    %516 = vmatprep.subr.bf16.mxu0 0
    %517 = vmatpush1.bf16.msra.mxu0 %v497
    %518 = vmatprep.subr.bf16.mxu0 0
    %519 = vmatpush1.bf16.msra.mxu0 %v498
    %520 = vmatprep.subr.bf16.mxu0 0
    %521 = vmatpush1.bf16.msra.mxu0 %v499
    %522 = vmatprep.subr.bf16.mxu0 0
    %523 = vmatpush1.bf16.msra.mxu0 %v500
    %524 = vmatprep.subr.bf16.mxu0 0
    %525 = vmatpush1.bf16.msra.mxu0 %v501
    %526 = vmatprep.subr.bf16.mxu0 0
    %527 = vmatpush1.bf16.msra.mxu0 0
    %528 = vmatprep.subr.bf16.mxu0 0
    %529 = vmatpush1.bf16.msra.mxu0 0
    %530 = vmatprep.subr.bf16.mxu0 0
    %531 = vmatpush1.bf16.msra.mxu0 0
    %532 = vmatprep.subr.bf16.mxu0 0
    %533 = vmatpush1.bf16.msra.mxu0 0
    %534 = vmatprep.subr.bf16.mxu0 0
    %535 = vmatpush1.bf16.msra.mxu0 0
    %536 = vmatprep.subr.bf16.mxu0 0
    %537 = vmatpush1.bf16.msra.mxu0 0
    %538 = vmatprep.subr.bf16.mxu0 0
    %539 = vmatpush1.bf16.msra.mxu0 0
    %540 = vmatprep.subr.bf16.mxu0 0
    %541 = vmatpush1.bf16.msra.mxu0 0
    %542 = vmatprep.mubr.bf16.mxu0 0
    %543 = vmatmul.mubr.bf16.gmra.mrb[0].mxu0 %v438
    %v544 = vpop.f32.mrb[0].mxu0
    %v545 = vadd.f32 %v460, %v544
    %v546 = vpop.f32.mrb[0].mxu0
    %v547 = vpop.f32.mrb[0].mxu0
    %v548 = vadd.f32 %v460, %v547
    %v549 = vpop.f32.mrb[0].mxu0
    %550 = vdwg.mxu0
    %551 = vst [vmem:[#allocation10] sm:$0xff] %v545
    %552 = vst [vmem:[#allocation10 + $0x8] sm:$0xff] %v548
    // Predicated region
    $region46: #{tpu_custom_call.1} parent=1 // pred_check
      _
    $region47: #{tpu_custom_call.1} parent=1 // pred_check_branch
      %554 = sbr.rel (0) target = $region49
    $region48: #{tpu_custom_call.1} parent=1 // pred_region
      %s556 = ssub.s32 256, 256
      %557 = vsyncadd [#allocation4], %s556
      %s558 = sshll.u32 [#allocation10], 4
      %s559 = int_to_ptr.vmem [resolvable:$true] %s558
      %564 = dma.vmem_to_hbm [thread:$0]  %s559, 256, %s7, [#allocation4], 128, 128, 8
    $region49: #{tpu_custom_call.1} parent=1 // pred_fallthru
      _
    // Predicated region
    $region50: #{tpu_custom_call.1} parent=1 // pred_check
      _
    $region51: #{tpu_custom_call.1} parent=1 // pred_check_branch
      %566 = sbr.rel (0) target = $region53
    $region52: #{tpu_custom_call.1} parent=1 // pred_region
      %567 = dma.done [#allocation4], 256
    $region53: #{tpu_custom_call.1} parent=1 // pred_fallthru
      _
    %568 = vsyncpa [#allocation3], 1
    %569 = vsyncpa [#allocation6], 1
    %570 = vsyncpa [#allocation9], 1
    %571 = vsyncpa [#allocation4], 1

</llo_original>
